<compile_context>
chip_gen: v7x
topology: tpu7x:2x2x1
jax: 0.10.0
libtpu: 0.0.40
codegen_flags: <defaults>
</compile_context>

<pallas_src>
import functools

import jax
import jax.numpy as jnp
import numpy as np
from jax.experimental import pallas as pl
from jax.experimental.pallas import tpu as pltpu


_GRIDLESS_MAX_B = 65536   # (16, B) f32 slab <= 4 MiB -> single full-array block
_LANE_TILE = 65536        # lane tile for the gridded large-B path (mult. of 128)


def _fdem_terms(x):
    """Per-lane loss terms from a (12, T) f32 block -> three (1, T) rows."""
    pred_p = x[0:1, :]
    pred_l = x[1:4, :]
    pred_s = x[4:6, :]
    true_p = x[6:7, :]
    true_l = x[7:10, :]
    true_s = x[10:12, :]

    # nn.BCELoss elementwise term, with PyTorch's log clamp at -100.
    log_p = jnp.maximum(jnp.log(pred_p), -100.0)
    log_1mp = jnp.maximum(jnp.log(1.0 - pred_p), -100.0)
    bce_lane = -(true_p * log_p + (1.0 - true_p) * log_1mp)        # (1, T)

    # positive_mask = true_presence.bool().float()
    mask = (true_p != 0.0).astype(jnp.float32)                     # (1, T)

    # Per-row feature means as explicit sublane-row adds (cheap VPU work).
    dl = pred_l - true_l
    dl2 = dl * dl
    loc_lane = (dl2[0:1, :] + dl2[1:2, :] + dl2[2:3, :]) * (1.0 / 3.0) * mask

    ds = pred_s - true_s
    ds2 = ds * ds
    sz_lane = (ds2[0:1, :] + ds2[1:2, :]) * 0.5 * mask
    return bce_lane, loc_lane, sz_lane


def _pack4(a, b, c, d):
    """Pack four (1,1)/scalar values into lanes 0..3 of a (1, 128) f32 row."""
    lane = jax.lax.broadcasted_iota(jnp.int32, (1, 128), 1)
    return (jnp.where(lane == 0, 1.0, 0.0) * a
            + jnp.where(lane == 1, 1.0, 0.0) * b
            + jnp.where(lane == 2, 1.0, 0.0) * c
            + jnp.where(lane == 3, 1.0, 0.0) * d)


def _fdem_loss_small_kernel(data_ref, out_ref, *, inv_b):
    # Gridless path: one full-array block, no scratch, no pl.when.
    x = data_ref[...].astype(jnp.float32)                          # (12, B)
    bce_lane, loc_lane, sz_lane = _fdem_terms(x)
    pres = jnp.sum(bce_lane, axis=1, keepdims=True) * inv_b        # (1, 1)
    locl = jnp.sum(loc_lane, axis=1, keepdims=True) * inv_b
    szl = jnp.sum(sz_lane, axis=1, keepdims=True) * inv_b
    total = pres + 0.5 * locl + 0.3 * szl
    out_ref[...] = _pack4(total, pres, locl, szl)                  # lane-dense store


def _fdem_loss_tiled_kernel(data_ref, out_ref, bce_acc, loc_acc, sz_acc,
                            *, batch, lane_tile, tiles_per_core):
    c = pl.program_id(0)          # core split ("parallel")
    i = pl.program_id(1)          # batch-tile reduction ("arbitrary")

    @pl.when(i == 0)
    def _init():
        bce_acc[...] = jnp.zeros_like(bce_acc)
        loc_acc[...] = jnp.zeros_like(loc_acc)
        sz_acc[...] = jnp.zeros_like(sz_acc)

    x = data_ref[...].astype(jnp.float32)                          # (12, tb)
    bce_lane, loc_lane, sz_lane = _fdem_terms(x)

    # Ragged-tail / duplicated-block mask from the *nominal* global start.
    # (Boundary-block padding and the clamped odd block both land here.)
    start = (c * tiles_per_core + i) * lane_tile
    lane = jax.lax.broadcasted_iota(jnp.int32, (1, lane_tile), 1)
    valid = (start + lane) < batch
    bce_lane = jnp.where(valid, bce_lane, 0.0)
    loc_lane = jnp.where(valid, loc_lane, 0.0)
    sz_lane = jnp.where(valid, sz_lane, 0.0)

    # Per-step cross-lane sums (XLU) into three single-vreg accumulators.
    bce_acc[...] += jnp.sum(bce_lane, axis=1, keepdims=True)
    loc_acc[...] += jnp.sum(loc_lane, axis=1, keepdims=True)
    sz_acc[...] += jnp.sum(sz_lane, axis=1, keepdims=True)

    @pl.when(i == pl.num_programs(1) - 1)
    def _finalize():
        # Partial sums for this core: lanes 0..2 of its output row.
        out_ref[0] = _pack4(bce_acc[...], loc_acc[...], sz_acc[...],
                            jnp.zeros((1, 1), jnp.float32))


@functools.partial(jax.jit, static_argnames=("lane_tile", "gridless_max_b"))
def fdem_inversion_loss(pred_presence, pred_location, pred_size, true_labels,
                        *, lane_tile=_LANE_TILE, gridless_max_b=_GRIDLESS_MAX_B):
    """Returns (total_loss, presence_loss, location_loss, size_loss) as f32 scalars."""
    B = pred_presence.shape[0]
    dtype = jnp.result_type(pred_presence, pred_location, pred_size, true_labels)

    # One (12, B) slab, batch on the lane axis. Built inside the jit so XLA
    # fuses the transposes + concat into a single relayout copy. The f32 cast
    # happens in-kernel (bf16 inputs are not re-materialized as f32 in HBM).
    data = jnp.concatenate(
        [
            pred_presence.astype(dtype).T,   # (1, B)
            pred_location.astype(dtype).T,   # (3, B)
            pred_size.astype(dtype).T,       # (2, B)
            true_labels.astype(dtype).T,     # (6, B)
        ],
        axis=0,
    )                                        # (12, B)

    if B <= gridless_max_b:
        out = pl.pallas_call(
            functools.partial(_fdem_loss_small_kernel, inv_b=1.0 / float(B)),
            out_shape=jax.ShapeDtypeStruct((1, 128), jnp.float32),
            in_specs=[pl.BlockSpec((12, B), lambda: (0, 0))],
            out_specs=pl.BlockSpec((1, 128), lambda: (0, 0)),
        )(data)
        return out[0, 0], out[0, 1], out[0, 2], out[0, 3]

    assert lane_tile % 128 == 0
    tiles_total = -(-B // lane_tile)
    tiles_per_core = -(-tiles_total // 2)

    def data_index_map(c, i):
        t = c * tiles_per_core + i
        # Clamp a fully-out-of-range nominal tile (odd tile count) onto the
        # last valid block; its contribution is masked to zero in-kernel.
        return (0, jnp.minimum(t, tiles_total - 1))

    kernel = functools.partial(
        _fdem_loss_tiled_kernel,
        batch=B, lane_tile=lane_tile, tiles_per_core=tiles_per_core)

    out = pl.pallas_call(
        kernel,
        out_shape=jax.ShapeDtypeStruct((2, 1, 128), jnp.float32),
        grid_spec=pltpu.PrefetchScalarGridSpec(
            num_scalar_prefetch=0,
            grid=(2, tiles_per_core),
            in_specs=[pl.BlockSpec((12, lane_tile), data_index_map)],
            out_specs=pl.BlockSpec((1, 1, 128), lambda c, i: (c, 0, 0)),
            scratch_shapes=[pltpu.VMEM((1, 1), jnp.float32)] * 3,
        ),
        compiler_params=pltpu.CompilerParams(
            dimension_semantics=("parallel", "arbitrary"),
        ),
    )(data)

    sums = out[0, 0, :] + out[1, 0, :]        # combine the two core partials
    inv_b = 1.0 / float(B)
    pres = sums[0] * inv_b
    locl = sums[1] * inv_b
    szl = sums[2] * inv_b
    total = pres + 0.5 * locl + 0.3 * szl
    return total, pres, locl, szl


def _reference(pp, plc, psz, lbl):
    tp = lbl[:, 0:1]
    tl = lbl[:, 1:4]
    ts = lbl[:, 4:6]
    bce = -(tp * jnp.maximum(jnp.log(pp), -100.0)
            + (1.0 - tp) * jnp.maximum(jnp.log(1.0 - pp), -100.0))
    pres = bce.mean()
    mask = (tp != 0.0).astype(jnp.float32)
    locl = (((plc - tl) ** 2).mean(axis=1, keepdims=True) * mask).mean()
    szl = (((psz - ts) ** 2).mean(axis=1, keepdims=True) * mask).mean()
    return pres + 0.5 * locl + 0.3 * szl, pres, locl, szl


def _make_inputs(key, b):
    k1, k2, k3, k4, k5, k6 = jax.random.split(key, 6)
    pred_presence = jax.nn.sigmoid(jax.random.normal(k1, (b, 1), jnp.float32))
    pred_location = jax.random.normal(k2, (b, 3), jnp.float32)
    pred_size = jax.random.normal(k3, (b, 2), jnp.float32)
    true_presence = (jax.random.uniform(k4, (b, 1)) > 0.5).astype(jnp.float32)
    true_location = jax.random.normal(k5, (b, 3), jnp.float32)
    true_size = jax.random.normal(k6, (b, 2), jnp.float32)
    true_labels = jnp.concatenate([true_presence, true_location, true_size], axis=1)
    return pred_presence, pred_location, pred_size, true_labels


if __name__ == "__main__":
    # 1) Small-batch gridless path (module-scale shapes: B=8).
    args = _make_inputs(jax.random.PRNGKey(0), 8)
    got = fdem_inversion_loss(*args)
    jax.block_until_ready(got)
    want = _reference(*args)
    for g, w in zip(got, want):
        np.testing.assert_allclose(np.asarray(g), np.asarray(w),
                                   rtol=1e-5, atol=1e-6)

    # 2) Tiled dual-core reduction path, shrunk so the test stays tiny:
    #    B=600 with a 256-lane tile -> 3 tiles (ragged tail + clamped odd block).
    args2 = _make_inputs(jax.random.PRNGKey(1), 600)
    got2 = fdem_inversion_loss(*args2, lane_tile=256, gridless_max_b=0)
    jax.block_until_ready(got2)
    want2 = _reference(*args2)
    for g, w in zip(got2, want2):
        np.testing.assert_allclose(np.asarray(g), np.asarray(w),
                                   rtol=1e-4, atol=1e-5)

    print("KERNEL_OK")
</pallas_src>

<mosaic_0001>
module attributes {stable_mosaic.version = 11 : i64} {
  func.func @_fdem_loss_small_kernel(%arg0: memref<12x8xf32, #tpu.memory_space<vmem>>, %arg1: memref<1x128xf32, #tpu.memory_space<vmem>>) attributes {dimension_semantics = [], scalar_prefetch = 0 : i64, scratch_operands = 0 : i64, tpu.core_type = #tpu.core_type<tc>} {
    %c0 = arith.constant 0 : index
    %c0_0 = arith.constant 0 : index
    %0 = vector.load %arg0[%c0, %c0_0] : memref<12x8xf32, #tpu.memory_space<vmem>>, vector<12x8xf32>
    %1 = vector.extract_strided_slice %0 {offsets = [0, 0], sizes = [1, 8], strides = [1, 1]} : vector<12x8xf32> to vector<1x8xf32>
    %2 = vector.extract_strided_slice %0 {offsets = [1, 0], sizes = [3, 8], strides = [1, 1]} : vector<12x8xf32> to vector<3x8xf32>
    %3 = vector.extract_strided_slice %0 {offsets = [4, 0], sizes = [2, 8], strides = [1, 1]} : vector<12x8xf32> to vector<2x8xf32>
    %4 = vector.extract_strided_slice %0 {offsets = [6, 0], sizes = [1, 8], strides = [1, 1]} : vector<12x8xf32> to vector<1x8xf32>
    %5 = vector.extract_strided_slice %0 {offsets = [7, 0], sizes = [3, 8], strides = [1, 1]} : vector<12x8xf32> to vector<3x8xf32>
    %6 = vector.extract_strided_slice %0 {offsets = [10, 0], sizes = [2, 8], strides = [1, 1]} : vector<12x8xf32> to vector<2x8xf32>
    %7 = math.log %1 : vector<1x8xf32>
    %cst = arith.constant -1.000000e+02 : f32
    %8 = vector.broadcast %cst : f32 to vector<1x8xf32>
    %9 = arith.maximumf %7, %8 : vector<1x8xf32>
    %cst_1 = arith.constant 1.000000e+00 : f32
    %10 = vector.broadcast %cst_1 : f32 to vector<1x8xf32>
    %11 = arith.subf %10, %1 : vector<1x8xf32>
    %12 = math.log %11 : vector<1x8xf32>
    %cst_2 = arith.constant -1.000000e+02 : f32
    %13 = vector.broadcast %cst_2 : f32 to vector<1x8xf32>
    %14 = arith.maximumf %12, %13 : vector<1x8xf32>
    %15 = arith.mulf %4, %9 : vector<1x8xf32>
    %cst_3 = arith.constant 1.000000e+00 : f32
    %16 = vector.broadcast %cst_3 : f32 to vector<1x8xf32>
    %17 = arith.subf %16, %4 : vector<1x8xf32>
    %18 = arith.mulf %17, %14 : vector<1x8xf32>
    %19 = arith.addf %15, %18 : vector<1x8xf32>
    %cst_4 = arith.constant 0.000000e+00 : f32
    %20 = vector.broadcast %cst_4 : f32 to vector<1x8xf32>
    %21 = arith.subf %20, %19 : vector<1x8xf32>
    %cst_5 = arith.constant 0.000000e+00 : f32
    %22 = vector.broadcast %cst_5 : f32 to vector<1x8xf32>
    %23 = arith.cmpf one, %4, %22 : vector<1x8xf32>
    %24 = arith.extui %23 : vector<1x8xi1> to vector<1x8xi32>
    %25 = arith.sitofp %24 : vector<1x8xi32> to vector<1x8xf32>
    %26 = arith.subf %2, %5 : vector<3x8xf32>
    %27 = arith.mulf %26, %26 : vector<3x8xf32>
    %28 = vector.extract_strided_slice %27 {offsets = [0, 0], sizes = [1, 8], strides = [1, 1]} : vector<3x8xf32> to vector<1x8xf32>
    %29 = vector.extract_strided_slice %27 {offsets = [1, 0], sizes = [1, 8], strides = [1, 1]} : vector<3x8xf32> to vector<1x8xf32>
    %30 = arith.addf %28, %29 : vector<1x8xf32>
    %31 = vector.extract_strided_slice %27 {offsets = [2, 0], sizes = [1, 8], strides = [1, 1]} : vector<3x8xf32> to vector<1x8xf32>
    %32 = arith.addf %30, %31 : vector<1x8xf32>
    %cst_6 = arith.constant 0.333333343 : f32
    %33 = vector.broadcast %cst_6 : f32 to vector<1x8xf32>
    %34 = arith.mulf %32, %33 : vector<1x8xf32>
    %35 = arith.mulf %34, %25 : vector<1x8xf32>
    %36 = arith.subf %3, %6 : vector<2x8xf32>
    %37 = arith.mulf %36, %36 : vector<2x8xf32>
    %38 = vector.extract_strided_slice %37 {offsets = [0, 0], sizes = [1, 8], strides = [1, 1]} : vector<2x8xf32> to vector<1x8xf32>
    %39 = vector.extract_strided_slice %37 {offsets = [1, 0], sizes = [1, 8], strides = [1, 1]} : vector<2x8xf32> to vector<1x8xf32>
    %40 = arith.addf %38, %39 : vector<1x8xf32>
    %cst_7 = arith.constant 5.000000e-01 : f32
    %41 = vector.broadcast %cst_7 : f32 to vector<1x8xf32>
    %42 = arith.mulf %40, %41 : vector<1x8xf32>
    %43 = arith.mulf %42, %25 : vector<1x8xf32>
    %cst_8 = arith.constant dense<0.000000e+00> : vector<1xf32>
    %44 = vector.multi_reduction <add>, %21, %cst_8 [1] : vector<1x8xf32> to vector<1xf32>
    %45 = vector.shape_cast %44 : vector<1xf32> to vector<1x1xf32>
    %cst_9 = arith.constant 1.250000e-01 : f32
    %46 = vector.broadcast %cst_9 : f32 to vector<1x1xf32>
    %47 = arith.mulf %45, %46 : vector<1x1xf32>
    %cst_10 = arith.constant dense<0.000000e+00> : vector<1xf32>
    %48 = vector.multi_reduction <add>, %35, %cst_10 [1] : vector<1x8xf32> to vector<1xf32>
    %49 = vector.shape_cast %48 : vector<1xf32> to vector<1x1xf32>
    %cst_11 = arith.constant 1.250000e-01 : f32
    %50 = vector.broadcast %cst_11 : f32 to vector<1x1xf32>
    %51 = arith.mulf %49, %50 : vector<1x1xf32>
    %cst_12 = arith.constant dense<0.000000e+00> : vector<1xf32>
    %52 = vector.multi_reduction <add>, %43, %cst_12 [1] : vector<1x8xf32> to vector<1xf32>
    %53 = vector.shape_cast %52 : vector<1xf32> to vector<1x1xf32>
    %cst_13 = arith.constant 1.250000e-01 : f32
    %54 = vector.broadcast %cst_13 : f32 to vector<1x1xf32>
    %55 = arith.mulf %53, %54 : vector<1x1xf32>
    %cst_14 = arith.constant 5.000000e-01 : f32
    %56 = vector.broadcast %cst_14 : f32 to vector<1x1xf32>
    %57 = arith.mulf %56, %51 : vector<1x1xf32>
    %58 = arith.addf %47, %57 : vector<1x1xf32>
    %cst_15 = arith.constant 3.000000e-01 : f32
    %59 = vector.broadcast %cst_15 : f32 to vector<1x1xf32>
    %60 = arith.mulf %59, %55 : vector<1x1xf32>
    %61 = arith.addf %58, %60 : vector<1x1xf32>
    %62 = tpu.iota {dimensions = array<i32: 1>} : vector<1x128xi32>
    %c0_i32 = arith.constant 0 : i32
    %63 = vector.broadcast %c0_i32 : i32 to vector<1x128xi32>
    %64 = arith.cmpi eq, %62, %63 : vector<1x128xi32>
    %cst_16 = arith.constant 1.000000e+00 : f32
    %cst_17 = arith.constant 0.000000e+00 : f32
    %65 = vector.broadcast %cst_16 : f32 to vector<1x128xf32>
    %66 = vector.broadcast %cst_17 : f32 to vector<1x128xf32>
    %67 = arith.select %64, %65, %66 : vector<1x128xi1>, vector<1x128xf32>
    %68 = vector.broadcast %61 : vector<1x1xf32> to vector<1x128xf32>
    %69 = arith.mulf %67, %68 : vector<1x128xf32>
    %c1_i32 = arith.constant 1 : i32
    %70 = vector.broadcast %c1_i32 : i32 to vector<1x128xi32>
    %71 = arith.cmpi eq, %62, %70 : vector<1x128xi32>
    %cst_18 = arith.constant 1.000000e+00 : f32
    %cst_19 = arith.constant 0.000000e+00 : f32
    %72 = vector.broadcast %cst_18 : f32 to vector<1x128xf32>
    %73 = vector.broadcast %cst_19 : f32 to vector<1x128xf32>
    %74 = arith.select %71, %72, %73 : vector<1x128xi1>, vector<1x128xf32>
    %75 = vector.broadcast %47 : vector<1x1xf32> to vector<1x128xf32>
    %76 = arith.mulf %74, %75 : vector<1x128xf32>
    %77 = arith.addf %69, %76 : vector<1x128xf32>
    %c2_i32 = arith.constant 2 : i32
    %78 = vector.broadcast %c2_i32 : i32 to vector<1x128xi32>
    %79 = arith.cmpi eq, %62, %78 : vector<1x128xi32>
    %cst_20 = arith.constant 1.000000e+00 : f32
    %cst_21 = arith.constant 0.000000e+00 : f32
    %80 = vector.broadcast %cst_20 : f32 to vector<1x128xf32>
    %81 = vector.broadcast %cst_21 : f32 to vector<1x128xf32>
    %82 = arith.select %79, %80, %81 : vector<1x128xi1>, vector<1x128xf32>
    %83 = vector.broadcast %51 : vector<1x1xf32> to vector<1x128xf32>
    %84 = arith.mulf %82, %83 : vector<1x128xf32>
    %85 = arith.addf %77, %84 : vector<1x128xf32>
    %c3_i32 = arith.constant 3 : i32
    %86 = vector.broadcast %c3_i32 : i32 to vector<1x128xi32>
    %87 = arith.cmpi eq, %62, %86 : vector<1x128xi32>
    %cst_22 = arith.constant 1.000000e+00 : f32
    %cst_23 = arith.constant 0.000000e+00 : f32
    %88 = vector.broadcast %cst_22 : f32 to vector<1x128xf32>
    %89 = vector.broadcast %cst_23 : f32 to vector<1x128xf32>
    %90 = arith.select %87, %88, %89 : vector<1x128xi1>, vector<1x128xf32>
    %91 = vector.broadcast %55 : vector<1x1xf32> to vector<1x128xf32>
    %92 = arith.mulf %90, %91 : vector<1x128xf32>
    %93 = arith.addf %85, %92 : vector<1x128xf32>
    %c0_24 = arith.constant 0 : index
    %c0_25 = arith.constant 0 : index
    %94 = vector.load %arg1[%c0_24, %c0_25] : memref<1x128xf32, #tpu.memory_space<vmem>>, vector<1x128xf32>
    tpu.vector_store %arg1[%c0_24, %c0_25], %93 {strides = array<i32>} : memref<1x128xf32, #tpu.memory_space<vmem>>, vector<1x128xf32>,
    return
  }
}

</mosaic_0001>

<llo_original>
// kernel: fdem_inversion_loss.1
$region0: #{fdem_inversion_loss.1}
  #allocation0 [shape = 'u32[]', space=smem, size = 0x4, offset = 0x4, fixed_abs, tag = 'smem constant byte address 0x4 - core index']
  #allocation1 [shape = 'u32[144,128]{1,0:T(1,128)}', space=vmem, size = 0x12000, scoped, tag = 'internal scratch']
  %s0 = inlined_call_operand.vmem [shape: f32[12,8], index: 0, kind: input, shape index: {}]
  %s1 = inlined_call_operand.vmem [shape: f32[1,128], index: 1, kind: output, shape index: {}]
  %s2 = sld [smem:[#allocation0]]
  $region14: #{fdem_inversion_loss.1} parent=0
    _
  %s4 = ssub.s32 1, %s2
  %s5 = scalar_select 0, %s4, %s2
  // Predicated region
  $region2: #{fdem_inversion_loss.1} parent=0 // pred_check
    _
  $region3: #{fdem_inversion_loss.1} parent=0 // pred_check_branch
    %7 = sbr.rel (0) target = $region5
  $region4: #{fdem_inversion_loss.1} parent=0 // pred_region
    _
  $region5: #{fdem_inversion_loss.1} parent=0 // pred_fallthru
    _
  %v8 = vld [vmem:[%s0] sm:$0xff]
  %v9 = vld [vmem:[%s0 + $0x8] sm:$0xf]
  %v10 = vlog2.pop %v8
  %v11 = vmul.f32 %v10, 0.6931472
  %v12 = vmax.f32 %v11, -100.0
  %v13 = vsub.f32 1.0, %v8
  %v14 = vlog2.pop %v13
  %v15 = vmul.f32 %v14, 0.6931472
  %v16 = vmax.f32 %v15, -100.0
  %v18 = vrot.slane %v12, 2
  %v20 = vmul.f32 %v8, %v18
  %v22 = vrot.slane %v16, 2
  %v24 = vmul.f32 %v13, %v22
  %v25 = vadd.f32 %v20, %v24
  %v26 = vsub.f32 0.0, %v25
  %vm27 = vcmp.ne.f32.partialorder %v8, 0.0
  %v28 = vsel %vm27, 1, 0
  %v29 = vcvt.s32.f32 %v28
  %vm32 = vcmask 1041408
  %v33 = vrot.slane %v8, 6
  %v34 = vrot.slane %v9, 6
  %v35 = vsel %vm32, %v33, %v34
  %v37 = vsub.f32 %v8, %v35
  %v38 = vmul.f32 %v37, %v37
  %v40 = vrot.slane %v38, 1
  %v42 = vadd.f32 %v38, %v40
  %v43 = vrot.slane %v38, 2
  %v45 = vadd.f32 %v42, %v43
  %v46 = vmul.f32 %v45, 0.33333334
  %v48 = vrot.slane %v29, 5
  %v50 = vmul.f32 %v46, %v48
  %v52 = vsub.f32 %v8, %v34
  %v53 = vmul.f32 %v52, %v52
  %v55 = vrot.slane %v53, 1
  %v57 = vadd.f32 %v53, %v55
  %v58 = vmul.f32 %v57, 0.5
  %v59 = vrot.slane %v29, 2
  %v61 = vmul.f32 %v58, %v59
  %vm62 = vcmask 63494
  %v63 = vsel %vm62, %v26, 0.0
  %64 = vadd.xlane.f32.xlu0 %v63
  %v65 = vpop.xlane.xlu0 %64
  %v66 = vmul.f32 %v65, 0.125
  %vm67 = vcmask 58369
  %v68 = vsel %vm67, %v50, 0.0
  %69 = vadd.xlane.f32.xlu0 %v68
  %v70 = vpop.xlane.xlu0 %69
  %v71 = vmul.f32 %v70, 0.125
  %vm72 = vcmask 61444
  %v73 = vsel %vm72, %v61, 0.0
  %74 = vadd.xlane.f32.xlu0 %v73
  %v75 = vpop.xlane.xlu0 %74
  %v76 = vmul.f32 %v75, 0.125
  %v77 = vmul.f32 %v71, 0.5
  %v79 = vrot.slane %v77, 3
  %v81 = vadd.f32 %v66, %v79
  %v82 = vmul.f32 %v76, 0.3
  %v84 = vrot.slane %v82, 6
  %v86 = vadd.f32 %v81, %v84
  %v87 = vlaneseq
  %v88 = vand.u32 %v87, 127
  %vm89 = vcmp.eq.s32.totalorder %v88, 0
  %v90 = vsel %vm89, 1.0, 0.0
  %92 = vset.pattern.permute.xlu0 0
  %93 = vperm.xlu0 %92, %v86
  %v94 = vpop.permute.xlu0 %93
  %v96 = vmul.f32 %v90, %v94
  %vm97 = vcmp.eq.s32.totalorder %v88, 1
  %v98 = vsel %vm97, 1.0, 0.0
  %v99 = vmul.f32 %v98, %v66
  %v100 = vadd.f32 %v96, %v99
  %vm101 = vcmp.eq.s32.totalorder %v88, 2
  %v102 = vsel %vm101, 1.0, 0.0
  %v103 = vmul.f32 %v102, %v71
  %v105 = vrot.slane %v103, 3
  %v107 = vadd.f32 %v100, %v105
  %vm108 = vcmp.eq.s32.totalorder %v88, 3
  %v109 = vsel %vm108, 1.0, 0.0
  %v110 = vmul.f32 %v109, %v76
  %v112 = vrot.slane %v110, 6
  %v114 = vadd.f32 %v107, %v112
  %115 = vst [vmem:[%s1 - $0x6] sm:$0x40] %v114
  // Predicated region
  $region6: #{fdem_inversion_loss.1} parent=0 // pred_check
    _
  $region7: #{fdem_inversion_loss.1} parent=0 // pred_check_branch
    %117 = sbr.rel (0) target = $region9
  $region8: #{fdem_inversion_loss.1} parent=0 // pred_region
    _
  $region9: #{fdem_inversion_loss.1} parent=0 // pred_fallthru
    _
  // Predicated region
  $region10: #{fdem_inversion_loss.1} parent=0 // pred_check
    _
  $region11: #{fdem_inversion_loss.1} parent=0 // pred_check_branch
    %119 = sbr.rel (0) target = $region13
  $region12: #{fdem_inversion_loss.1} parent=0 // pred_region
    _
  $region13: #{fdem_inversion_loss.1} parent=0 // pred_fallthru
    _

</llo_original>
